<compile_context>
chip_gen: v7x
topology: tpu7x:2x2x1
jax: 0.10.0
libtpu: 0.0.40
codegen_flags: <defaults>
</compile_context>

<pallas_src>
import functools

import jax
import jax.numpy as jnp
from jax.experimental import pallas as pl
from jax.experimental.pallas import tpu as pltpu


def _round_up(a, b):
    return ((a + b - 1) // b) * b


# ---------------------------------------------------------------------------
# Pass 1: per-tile partial BatchNorm statistics.  No y write-back to HBM.
# Input is a (2*C_in, TM) lane-dense block; stats are lane reductions.
# ---------------------------------------------------------------------------
def _stats_kernel(hs_ref, w_ref, stats_ref):
    a = jnp.maximum(hs_ref[...], 0.0)                          # ReLU
    # (C_out, 2*C_in) @ (2*C_in, TM) -> (C_out, TM)
    y = jnp.dot(w_ref[...], a, preferred_element_type=jnp.float32)
    s = jnp.sum(y, axis=1, keepdims=True)                      # (C_out, 1)
    q = jnp.sum(y * y, axis=1, keepdims=True)                  # (C_out, 1)
    stats_ref[0] = jnp.concatenate([s, q], axis=1)             # (C_out, 2)


# ---------------------------------------------------------------------------
# Pass 2: fused ReLU -> block-diag 1x1 conv (BN scale folded into weights)
# -> bias add.  Writes the final normalized output in lane-dense (C_out, TM)
# blocks with a single unmasked full-tile store.
# ---------------------------------------------------------------------------
def _fused_conv_bn_kernel(hs_ref, wf_ref, bias_ref, o_ref):
    a = jnp.maximum(hs_ref[...], 0.0)
    y = jnp.dot(wf_ref[...], a, preferred_element_type=jnp.float32)
    o_ref[...] = y + bias_ref[...]                              # (C_out,1) bcast


@functools.partial(jax.jit, static_argnames=("stride",))
def shortcut_forward(x_nchw, w1, w2, gamma, beta, *, stride, eps=1e-5):
    """x_nchw: (N, C_in, H, W) f32.  w1, w2: (C_in, C_out//2) 1x1-conv weights
    (channel-last matmul layout).  gamma/beta: (C_out,) BN affine.  NCHW out."""
    N, C_in, H, W = x_nchw.shape
    C_half = w1.shape[1]
    C_out = 2 * C_half

    x = x_nchw.astype(jnp.float32)

    # Branch 1: avg_pool2d(relu(x), 1, stride) == strided subsample.
    h1 = x[:, :, ::stride, ::stride]
    # Branch 2: F.pad(h, (-1,1,-1,1)) crops the first row/col and zero-pads the
    # last row/col (relu(0) == 0, so padding before the in-kernel ReLU is
    # equivalent), then the same strided subsample.
    h_shift = jnp.pad(x[:, :, 1:, 1:], ((0, 0), (0, 0), (0, 1), (0, 1)))
    h2 = h_shift[:, :, ::stride, ::stride]

    Ho, Wo = h1.shape[2], h1.shape[3]
    M = N * Ho * Wo

    # Channel-first, lane-dense layout: both branch inputs stacked on the
    # sublane axis -> (2*C_in, M), M = (n, ho, wo) row-major.
    h1t = jnp.transpose(h1, (1, 0, 2, 3)).reshape(C_in, M)
    h2t = jnp.transpose(h2, (1, 0, 2, 3)).reshape(C_in, M)
    hs = jnp.concatenate([h1t, h2t], axis=0)                   # (2*C_in, M)

    # VMEM-aware tile width: keep each input block <= ~4 MiB while staying a
    # multiple of 128 lanes.  Padded columns are zeros -> relu(0) @ w == 0 ->
    # they contribute nothing to the statistics (divisor uses the true M).
    bytes_per_col = 2 * C_in * 4
    tm_cap = max(128, ((4 << 20) // bytes_per_col) // 128 * 128)
    TM = min(tm_cap, 8192, _round_up(M, 128))
    M_pad = _round_up(M, TM)
    if M_pad != M:
        hs = jnp.pad(hs, ((0, 0), (0, M_pad - M)))
    num_tiles = M_pad // TM
    grid = (num_tiles,)

    # Block-diagonal combined weight: [[w1^T, 0], [0, w2^T]] -> (C_out, 2*C_in)
    # so cat([conv1(h1), conv2(h2)], channel) == W_comb @ stack([h1, h2]).
    w1t = jnp.transpose(w1).astype(jnp.float32)                 # (C_half, C_in)
    w2t = jnp.transpose(w2).astype(jnp.float32)
    w_comb = jnp.zeros((C_out, 2 * C_in), jnp.float32)
    w_comb = w_comb.at[:C_half, :C_in].set(w1t)
    w_comb = w_comb.at[C_half:, C_in:].set(w2t)

    # ---- pass 1: batch statistics only (y never written to HBM) ----
    stats = pl.pallas_call(
        _stats_kernel,
        out_shape=jax.ShapeDtypeStruct((num_tiles, C_out, 2), jnp.float32),
        grid=grid,
        in_specs=[
            pl.BlockSpec((2 * C_in, TM), lambda i: (0, i)),
            pl.BlockSpec((C_out, 2 * C_in), lambda i: (0, 0)),
        ],
        out_specs=pl.BlockSpec((1, C_out, 2), lambda i: (i, 0, 0)),
        compiler_params=pltpu.CompilerParams(
            dimension_semantics=("parallel",)),
    )(hs, w_comb)

    col_sum = jnp.sum(stats[:, :, 0], axis=0)                   # (C_out,)
    col_sq = jnp.sum(stats[:, :, 1], axis=0)

    # BatchNorm2d training mode: batch mean, biased variance.
    mean = col_sum / M
    var = col_sq / M - mean * mean
    # TODO(synk): E[y^2] - E[y]^2 in f32 can cancel for very large |mean|;
    # a centered/Welford second pass would be more robust at extreme scales.
    var = jnp.maximum(var, 0.0)
    scale = gamma.astype(jnp.float32) * jax.lax.rsqrt(var + eps)  # (C_out,)
    bias = beta.astype(jnp.float32) - mean * scale                # (C_out,)

    # Fold BN into the 1x1 convs: out = relu(h) @ (w * scale) + bias.
    w_folded = w_comb * scale[:, None]
    bias2d = bias.reshape(C_out, 1)

    # ---- pass 2: fused conv + BN, lane-dense (C_out, M) output ----
    out_t = pl.pallas_call(
        _fused_conv_bn_kernel,
        out_shape=jax.ShapeDtypeStruct((C_out, M_pad), jnp.float32),
        grid=grid,
        in_specs=[
            pl.BlockSpec((2 * C_in, TM), lambda i: (0, i)),
            pl.BlockSpec((C_out, 2 * C_in), lambda i: (0, 0)),
            pl.BlockSpec((C_out, 1), lambda i: (0, 0)),
        ],
        out_specs=pl.BlockSpec((C_out, TM), lambda i: (0, i)),
        compiler_params=pltpu.CompilerParams(
            dimension_semantics=("parallel",)),
    )(hs, w_folded, bias2d)

    out = out_t[:, :M].reshape(C_out, N, Ho, Wo)
    return jnp.transpose(out, (1, 0, 2, 3))                     # back to NCHW


def shortcut_ref(x, w1, w2, gamma, beta, *, stride, eps=1e-5):
    """Pure-JAX reference matching the PyTorch forward (NCHW)."""
    h = jnp.maximum(x, 0.0)
    h1 = h[:, :, ::stride, ::stride]
    hp = jnp.pad(h[:, :, 1:, 1:], ((0, 0), (0, 0), (0, 1), (0, 1)))
    h2 = hp[:, :, ::stride, ::stride]
    y1 = jnp.einsum('nchw,cd->ndhw', h1, w1)
    y2 = jnp.einsum('nchw,cd->ndhw', h2, w2)
    y = jnp.concatenate([y1, y2], axis=1)
    mean = y.mean(axis=(0, 2, 3), keepdims=True)
    var = ((y - mean) ** 2).mean(axis=(0, 2, 3), keepdims=True)
    g = gamma.reshape(1, -1, 1, 1)
    b = beta.reshape(1, -1, 1, 1)
    return (y - mean) * jax.lax.rsqrt(var + eps) * g + b


if __name__ == "__main__":
    # Module config: Shortcut(in_ch=4, out_ch=8, stride=2)
    in_ch, out_ch, stride = 4, 8, 2
    N, H, W = 2, 16, 16

    key = jax.random.PRNGKey(0)
    kx, k1, k2, kg, kb = jax.random.split(key, 5)

    x = jax.random.normal(kx, (N, in_ch, H, W), dtype=jnp.float32)
    # conv weights: PyTorch shape is (out_ch//2, in_ch, 1, 1); stored here as
    # (in_ch, out_ch//2) for the channel-last matmul.
    w1 = jax.random.normal(k1, (in_ch, out_ch // 2), dtype=jnp.float32) * 0.5
    w2 = jax.random.normal(k2, (in_ch, out_ch // 2), dtype=jnp.float32) * 0.5
    # BatchNorm affine params (perturbed to exercise the affine path).
    gamma = 1.0 + 0.1 * jax.random.normal(kg, (out_ch,), dtype=jnp.float32)
    beta = 0.1 * jax.random.normal(kb, (out_ch,), dtype=jnp.float32)

    out = shortcut_forward(x, w1, w2, gamma, beta, stride=stride)
    out = jax.block_until_ready(out)

    ref = shortcut_ref(x, w1, w2, gamma, beta, stride=stride)
    assert out.shape == (N, out_ch, H // stride, W // stride), out.shape
    assert jnp.allclose(out, ref, atol=1e-4, rtol=1e-4), \
        float(jnp.max(jnp.abs(out - ref)))

    print("KERNEL_OK")
</pallas_src>

<mosaic_0001>
module attributes {stable_mosaic.version = 11 : i64} {
  func.func @_stats_kernel(%arg0: i32, %arg1: memref<8x128xf32, #tpu.memory_space<vmem>>, %arg2: memref<8x8xf32, #tpu.memory_space<vmem>>, %arg3: memref<1x8x2xf32, #tpu.memory_space<vmem>>) attributes {dimension_semantics = [#tpu.dimension_semantics<parallel>], iteration_bounds = array<i64: 1>, scalar_prefetch = 0 : i64, scratch_operands = 0 : i64, tpu.core_type = #tpu.core_type<tc>, window_params = [{transform_indices = @transform_0, window_bounds = array<i64: 8, 128>}, {pipeline_mode = #tpu.pipeline_mode<synchronous>, transform_indices = @transform_1, window_bounds = array<i64: 8, 8>}, {transform_indices = @transform_2, window_bounds = array<i64: 1, 8, 2>}]} {
    %c0 = arith.constant 0 : index
    %c0_0 = arith.constant 0 : index
    %0 = vector.load %arg1[%c0, %c0_0] : memref<8x128xf32, #tpu.memory_space<vmem>>, vector<8x128xf32>
    %cst = arith.constant 0.000000e+00 : f32
    %1 = vector.broadcast %cst : f32 to vector<8x128xf32>
    %2 = arith.maximumf %0, %1 : vector<8x128xf32>
    %c0_1 = arith.constant 0 : index
    %c0_2 = arith.constant 0 : index
    %3 = vector.load %arg2[%c0_1, %c0_2] : memref<8x8xf32, #tpu.memory_space<vmem>>, vector<8x8xf32>
    %cst_3 = arith.constant dense<0.000000e+00> : vector<8x128xf32>
    %4 = tpu.matmul %3, %2, %cst_3 {dimension_numbers = #tpu.dot_dimension_numbers<[1], [0], [0], [1], [0, 0, 1, 1], [], []>} : vector<8x8xf32>, vector<8x128xf32>, vector<8x128xf32> -> vector<8x128xf32>
    %cst_4 = arith.constant dense<0.000000e+00> : vector<8xf32>
    %5 = vector.multi_reduction <add>, %4, %cst_4 [1] : vector<8x128xf32> to vector<8xf32>
    %6 = vector.shape_cast %5 : vector<8xf32> to vector<8x1xf32>
    %7 = arith.mulf %4, %4 : vector<8x128xf32>
    %cst_5 = arith.constant dense<0.000000e+00> : vector<8xf32>
    %8 = vector.multi_reduction <add>, %7, %cst_5 [1] : vector<8x128xf32> to vector<8xf32>
    %9 = vector.shape_cast %8 : vector<8xf32> to vector<8x1xf32>
    %10 = tpu.concatenate %6, %9 in 1 : vector<8x1xf32>, vector<8x1xf32> -> vector<8x2xf32>
    %c0_6 = arith.constant 0 : index
    %c0_7 = arith.constant 0 : index
    %c0_8 = arith.constant 0 : index
    %11 = vector.load %arg3[%c0_6, %c0_7, %c0_8] : memref<1x8x2xf32, #tpu.memory_space<vmem>>, vector<1x8x2xf32>
    %12 = vector.shape_cast %11 : vector<1x8x2xf32> to vector<8x2xf32>
    %13 = vector.shape_cast %10 : vector<8x2xf32> to vector<1x8x2xf32>
    tpu.vector_store %arg3[%c0_6, %c0_7, %c0_8], %13 {strides = array<i32>} : memref<1x8x2xf32, #tpu.memory_space<vmem>>, vector<1x8x2xf32>,
    return
  }
  func.func @transform_0(%arg0: i32) -> (i32, i32) {
    %c0_i32 = arith.constant 0 : i32
    %c0_i32_0 = arith.constant 0 : i32
    return %c0_i32, %arg0 : i32, i32
  }
  func.func @transform_1(%arg0: i32) -> (i32, i32) {
    %c0_i32 = arith.constant 0 : i32
    %c0_i32_0 = arith.constant 0 : i32
    %c0_i32_1 = arith.constant 0 : i32
    return %c0_i32, %c0_i32_0 : i32, i32
  }
  func.func @transform_2(%arg0: i32) -> (i32, i32, i32) {
    %c0_i32 = arith.constant 0 : i32
    %c0_i32_0 = arith.constant 0 : i32
    %c0_i32_1 = arith.constant 0 : i32
    return %arg0, %c0_i32, %c0_i32_0 : i32, i32, i32
  }
}

module attributes {stable_mosaic.version = 11 : i64} {
  func.func @_fused_conv_bn_kernel(%arg0: i32, %arg1: memref<8x128xf32, #tpu.memory_space<vmem>>, %arg2: memref<8x8xf32, #tpu.memory_space<vmem>>, %arg3: memref<8x1xf32, #tpu.memory_space<vmem>>, %arg4: memref<8x128xf32, #tpu.memory_space<vmem>>) attributes {dimension_semantics = [#tpu.dimension_semantics<parallel>], iteration_bounds = array<i64: 1>, scalar_prefetch = 0 : i64, scratch_operands = 0 : i64, tpu.core_type = #tpu.core_type<tc>, window_params = [{transform_indices = @transform_0, window_bounds = array<i64: 8, 128>}, {pipeline_mode = #tpu.pipeline_mode<synchronous>, transform_indices = @transform_1, window_bounds = array<i64: 8, 8>}, {pipeline_mode = #tpu.pipeline_mode<synchronous>, transform_indices = @transform_2, window_bounds = array<i64: 8, 1>}, {transform_indices = @transform_3, window_bounds = array<i64: 8, 128>}]} {
    %c0 = arith.constant 0 : index
    %c0_0 = arith.constant 0 : index
    %0 = vector.load %arg1[%c0, %c0_0] : memref<8x128xf32, #tpu.memory_space<vmem>>, vector<8x128xf32>
    %cst = arith.constant 0.000000e+00 : f32
    %1 = vector.broadcast %cst : f32 to vector<8x128xf32>
    %2 = arith.maximumf %0, %1 : vector<8x128xf32>
    %c0_1 = arith.constant 0 : index
    %c0_2 = arith.constant 0 : index
    %3 = vector.load %arg2[%c0_1, %c0_2] : memref<8x8xf32, #tpu.memory_space<vmem>>, vector<8x8xf32>
    %cst_3 = arith.constant dense<0.000000e+00> : vector<8x128xf32>
    %4 = tpu.matmul %3, %2, %cst_3 {dimension_numbers = #tpu.dot_dimension_numbers<[1], [0], [0], [1], [0, 0, 1, 1], [], []>} : vector<8x8xf32>, vector<8x128xf32>, vector<8x128xf32> -> vector<8x128xf32>
    %c0_4 = arith.constant 0 : index
    %c0_5 = arith.constant 0 : index
    %5 = vector.load %arg3[%c0_4, %c0_5] : memref<8x1xf32, #tpu.memory_space<vmem>>, vector<8x1xf32>
    %6 = vector.broadcast %5 : vector<8x1xf32> to vector<8x128xf32>
    %7 = arith.addf %4, %6 : vector<8x128xf32>
    %c0_6 = arith.constant 0 : index
    %c0_7 = arith.constant 0 : index
    %8 = vector.load %arg4[%c0_6, %c0_7] : memref<8x128xf32, #tpu.memory_space<vmem>>, vector<8x128xf32>
    tpu.vector_store %arg4[%c0_6, %c0_7], %7 {strides = array<i32>} : memref<8x128xf32, #tpu.memory_space<vmem>>, vector<8x128xf32>,
    return
  }
  func.func @transform_0(%arg0: i32) -> (i32, i32) {
    %c0_i32 = arith.constant 0 : i32
    %c0_i32_0 = arith.constant 0 : i32
    return %c0_i32, %arg0 : i32, i32
  }
  func.func @transform_1(%arg0: i32) -> (i32, i32) {
    %c0_i32 = arith.constant 0 : i32
    %c0_i32_0 = arith.constant 0 : i32
    %c0_i32_1 = arith.constant 0 : i32
    return %c0_i32, %c0_i32_0 : i32, i32
  }
  func.func @transform_2(%arg0: i32) -> (i32, i32) {
    %c0_i32 = arith.constant 0 : i32
    %c0_i32_0 = arith.constant 0 : i32
    %c0_i32_1 = arith.constant 0 : i32
    return %c0_i32, %c0_i32_0 : i32, i32
  }
  func.func @transform_3(%arg0: i32) -> (i32, i32) {
    %c0_i32 = arith.constant 0 : i32
    %c0_i32_0 = arith.constant 0 : i32
    return %c0_i32, %arg0 : i32, i32
  }
}

</mosaic_0001>

<llo_original>
// kernel: shortcut_forward.2
$region0: #{shortcut_forward.2}
  #allocation0 [shape = 'u32[]', space=smem, size = 0x4, offset = 0x4, fixed_abs, tag = 'smem constant byte address 0x4 - core index']
  #allocation1 [shape = 'u32[144,128]{1,0:T(1,128)}', space=vmem, size = 0x12000, scoped, tag = 'internal scratch']
  %s0 = inlined_call_operand.vmem [shape: f32[8,128], index: 0, kind: input, shape index: {}]
  %s1 = inlined_call_operand.vmem [shape: f32[8,8], index: 1, kind: input, shape index: {}]
  %s2 = inlined_call_operand.vmem [shape: f32[1,8,2], index: 2, kind: output, shape index: {}]
  %s3 = sld [smem:[#allocation0]]
  $region18: #{shortcut_forward.2} parent=0
    _
  %s5 = ssub.s32 1, %s3
  %s6 = scalar_select 0, %s5, %s3
  // Predicated region
  $region2: #{shortcut_forward.2} parent=0 // pred_check
    _
  $region3: #{shortcut_forward.2} parent=0 // pred_check_branch
    %8 = sbr.rel (0) target = $region5
  $region4: #{shortcut_forward.2} parent=0 // pred_region
    _
  $region5: #{shortcut_forward.2} parent=0 // pred_fallthru
    _
  // Predicated region
  $region6: #{shortcut_forward.2} parent=0 // pred_check
    _
  $region7: #{shortcut_forward.2} parent=0 // pred_check_branch
    %10 = sbr.rel (0) target = $region9
  $region8: #{shortcut_forward.2} parent=0 // pred_region
    _
  $region9: #{shortcut_forward.2} parent=0 // pred_fallthru
    _
  %v11 = vld [vmem:[%s0] sm:$0xff]
  %v12 = vmax.f32 %v11, 0.0
  %v13 = vld [vmem:[%s1] sm:$0xff]
  %vm14 = vcmask 64512
  %v16 = vsel %vm14, %v13, 0
  %18 = vmatprep.subr.mxu0 0.0
  %19 = vmatpush1.msra.mxu0 %v12
  %20 = vmatprep.subr.mxu0 0.0
  %21 = vmatpush1.msra.mxu0 0.0
  %22 = vmatprep.subr.mxu0 0.0
  %23 = vmatpush1.msra.mxu0 0.0
  %24 = vmatprep.subr.mxu0 0.0
  %25 = vmatpush1.msra.mxu0 0.0
  %26 = vmatprep.subr.mxu0 0.0
  %27 = vmatpush1.msra.mxu0 0.0
  %28 = vmatprep.subr.mxu0 0.0
  %29 = vmatpush1.msra.mxu0 0.0
  %30 = vmatprep.subr.mxu0 0.0
  %31 = vmatpush1.msra.mxu0 0.0
  %32 = vmatprep.subr.mxu0 0.0
  %33 = vmatpush1.msra.mxu0 0.0
  %34 = vmatprep.subr.mxu0 0.0
  %35 = vmatpush1.msra.mxu0 0.0
  %36 = vmatprep.subr.mxu0 0.0
  %37 = vmatpush1.msra.mxu0 0.0
  %38 = vmatprep.subr.mxu0 0.0
  %39 = vmatpush1.msra.mxu0 0.0
  %40 = vmatprep.subr.mxu0 0.0
  %41 = vmatpush1.msra.mxu0 0.0
  %42 = vmatprep.subr.mxu0 0.0
  %43 = vmatpush1.msra.mxu0 0.0
  %44 = vmatprep.subr.mxu0 0.0
  %45 = vmatpush1.msra.mxu0 0.0
  %46 = vmatprep.subr.mxu0 0.0
  %47 = vmatpush1.msra.mxu0 0.0
  %48 = vmatprep.subr.mxu0 0.0
  %49 = vmatpush1.msra.mxu0 0.0
  %50 = vmatprep.subr.mxu0 0.0
  %51 = vmatpush1.msra.mxu0 0.0
  %52 = vmatprep.subr.mxu0 0.0
  %53 = vmatpush1.msra.mxu0 0.0
  %54 = vmatprep.subr.mxu0 0.0
  %55 = vmatpush1.msra.mxu0 0.0
  %56 = vmatprep.subr.mxu0 0.0
  %57 = vmatpush1.msra.mxu0 0.0
  %58 = vmatprep.subr.mxu0 0.0
  %59 = vmatpush1.msra.mxu0 0.0
  %60 = vmatprep.subr.mxu0 0.0
  %61 = vmatpush1.msra.mxu0 0.0
  %62 = vmatprep.subr.mxu0 0.0
  %63 = vmatpush1.msra.mxu0 0.0
  %64 = vmatprep.subr.mxu0 0.0
  %65 = vmatpush1.msra.mxu0 0.0
  %66 = vmatprep.subr.mxu0 0.0
  %67 = vmatpush1.msra.mxu0 0.0
  %68 = vmatprep.subr.mxu0 0.0
  %69 = vmatpush1.msra.mxu0 0.0
  %70 = vmatprep.subr.mxu0 0.0
  %71 = vmatpush1.msra.mxu0 0.0
  %72 = vmatprep.subr.mxu0 0.0
  %73 = vmatpush1.msra.mxu0 0.0
  %74 = vmatprep.subr.mxu0 0.0
  %75 = vmatpush1.msra.mxu0 0.0
  %76 = vmatprep.subr.mxu0 0.0
  %77 = vmatpush1.msra.mxu0 0.0
  %78 = vmatprep.subr.mxu0 0.0
  %79 = vmatpush1.msra.mxu0 0.0
  %80 = vmatprep.subr.mxu0 0.0
  %81 = vmatpush1.msra.mxu0 0.0
  %82 = vmatprep.mubr.f32.mxu0 0.0
  %83 = vmatmul.mubr.f32.gmra.mrb[0].mxu0 %v16
  %v84 = vpop.f32.mrb[0].mxu0
  %v85 = vadd.f32 0.0, %v84
  %v86 = vpop.f32.mrb[0].mxu0
  %87 = vdwg.mxu0
  %88 = vadd.xlane.f32.xlu0 %v85
  %v89 = vpop.xlane.xlu0 %88
  %v90 = vmul.f32 %v85, %v85
  %91 = vadd.xlane.f32.xlu0 %v90
  %v92 = vpop.xlane.xlu0 %91
  %vm93 = vcmask 7168
  %v94 = vsel %vm93, %v89, %v92
  %vm95 = vcmask 15360
  %96 = vst.msk [vmem:[%s2] sm:$0xff] %vm95, %v94
  // Predicated region
  $region10: #{shortcut_forward.2} parent=0 // pred_check
    _
  $region11: #{shortcut_forward.2} parent=0 // pred_check_branch
    %98 = sbr.rel (0) target = $region13
  $region12: #{shortcut_forward.2} parent=0 // pred_region
    _
  $region13: #{shortcut_forward.2} parent=0 // pred_fallthru
    _
  // Predicated region
  $region14: #{shortcut_forward.2} parent=0 // pred_check
    _
  $region15: #{shortcut_forward.2} parent=0 // pred_check_branch
    %100 = sbr.rel (0) target = $region17
  $region16: #{shortcut_forward.2} parent=0 // pred_region
    _
  $region17: #{shortcut_forward.2} parent=0 // pred_fallthru
    _

// kernel: shortcut_forward.3
$region0: #{shortcut_forward.3}
  #allocation0 [shape = 'u32[]', space=smem, size = 0x4, offset = 0x4, fixed_abs, tag = 'smem constant byte address 0x4 - core index']
  #allocation1 [shape = 'u32[144,128]{1,0:T(1,128)}', space=vmem, size = 0x12000, scoped, tag = 'internal scratch']
  %s0 = inlined_call_operand.vmem [shape: f32[8,128], index: 0, kind: input, shape index: {}]
  %s1 = inlined_call_operand.vmem [shape: f32[8,8], index: 1, kind: input, shape index: {}]
  %s2 = inlined_call_operand.vmem [shape: f32[8,1], index: 2, kind: input, shape index: {}]
  %s3 = inlined_call_operand.vmem [shape: f32[8,128], index: 3, kind: output, shape index: {}]
  %s4 = sld [smem:[#allocation0]]
  $region22: #{shortcut_forward.3} parent=0
    _
  %s6 = ssub.s32 1, %s4
  %s7 = scalar_select 0, %s6, %s4
  // Predicated region
  $region2: #{shortcut_forward.3} parent=0 // pred_check
    _
  $region3: #{shortcut_forward.3} parent=0 // pred_check_branch
    %9 = sbr.rel (0) target = $region5
  $region4: #{shortcut_forward.3} parent=0 // pred_region
    _
  $region5: #{shortcut_forward.3} parent=0 // pred_fallthru
    _
  // Predicated region
  $region6: #{shortcut_forward.3} parent=0 // pred_check
    _
  $region7: #{shortcut_forward.3} parent=0 // pred_check_branch
    %11 = sbr.rel (0) target = $region9
  $region8: #{shortcut_forward.3} parent=0 // pred_region
    _
  $region9: #{shortcut_forward.3} parent=0 // pred_fallthru
    _
  // Predicated region
  $region10: #{shortcut_forward.3} parent=0 // pred_check
    _
  $region11: #{shortcut_forward.3} parent=0 // pred_check_branch
    %13 = sbr.rel (0) target = $region13
  $region12: #{shortcut_forward.3} parent=0 // pred_region
    _
  $region13: #{shortcut_forward.3} parent=0 // pred_fallthru
    _
  %v14 = vld [vmem:[%s0] sm:$0xff]
  %v15 = vmax.f32 %v14, 0.0
  %v16 = vld [vmem:[%s1] sm:$0xff]
  %v17 = vld [vmem:[%s2] sm:$0xff]
  %19 = vset.pattern.permute.xlu0 0
  %20 = vperm.xlu0 %19, %v17
  %v21 = vpop.permute.xlu0 %20
  %vm23 = vcmask 64512
  %v25 = vsel %vm23, %v16, 0
  %27 = vmatprep.subr.mxu0 0.0
  %28 = vmatpush1.msra.mxu0 %v15
  %29 = vmatprep.subr.mxu0 0.0
  %30 = vmatpush1.msra.mxu0 0.0
  %31 = vmatprep.subr.mxu0 0.0
  %32 = vmatpush1.msra.mxu0 0.0
  %33 = vmatprep.subr.mxu0 0.0
  %34 = vmatpush1.msra.mxu0 0.0
  %35 = vmatprep.subr.mxu0 0.0
  %36 = vmatpush1.msra.mxu0 0.0
  %37 = vmatprep.subr.mxu0 0.0
  %38 = vmatpush1.msra.mxu0 0.0
  %39 = vmatprep.subr.mxu0 0.0
  %40 = vmatpush1.msra.mxu0 0.0
  %41 = vmatprep.subr.mxu0 0.0
  %42 = vmatpush1.msra.mxu0 0.0
  %43 = vmatprep.subr.mxu0 0.0
  %44 = vmatpush1.msra.mxu0 0.0
  %45 = vmatprep.subr.mxu0 0.0
  %46 = vmatpush1.msra.mxu0 0.0
  %47 = vmatprep.subr.mxu0 0.0
  %48 = vmatpush1.msra.mxu0 0.0
  %49 = vmatprep.subr.mxu0 0.0
  %50 = vmatpush1.msra.mxu0 0.0
  %51 = vmatprep.subr.mxu0 0.0
  %52 = vmatpush1.msra.mxu0 0.0
  %53 = vmatprep.subr.mxu0 0.0
  %54 = vmatpush1.msra.mxu0 0.0
  %55 = vmatprep.subr.mxu0 0.0
  %56 = vmatpush1.msra.mxu0 0.0
  %57 = vmatprep.subr.mxu0 0.0
  %58 = vmatpush1.msra.mxu0 0.0
  %59 = vmatprep.subr.mxu0 0.0
  %60 = vmatpush1.msra.mxu0 0.0
  %61 = vmatprep.subr.mxu0 0.0
  %62 = vmatpush1.msra.mxu0 0.0
  %63 = vmatprep.subr.mxu0 0.0
  %64 = vmatpush1.msra.mxu0 0.0
  %65 = vmatprep.subr.mxu0 0.0
  %66 = vmatpush1.msra.mxu0 0.0
  %67 = vmatprep.subr.mxu0 0.0
  %68 = vmatpush1.msra.mxu0 0.0
  %69 = vmatprep.subr.mxu0 0.0
  %70 = vmatpush1.msra.mxu0 0.0
  %71 = vmatprep.subr.mxu0 0.0
  %72 = vmatpush1.msra.mxu0 0.0
  %73 = vmatprep.subr.mxu0 0.0
  %74 = vmatpush1.msra.mxu0 0.0
  %75 = vmatprep.subr.mxu0 0.0
  %76 = vmatpush1.msra.mxu0 0.0
  %77 = vmatprep.subr.mxu0 0.0
  %78 = vmatpush1.msra.mxu0 0.0
  %79 = vmatprep.subr.mxu0 0.0
  %80 = vmatpush1.msra.mxu0 0.0
  %81 = vmatprep.subr.mxu0 0.0
  %82 = vmatpush1.msra.mxu0 0.0
  %83 = vmatprep.subr.mxu0 0.0
  %84 = vmatpush1.msra.mxu0 0.0
  %85 = vmatprep.subr.mxu0 0.0
  %86 = vmatpush1.msra.mxu0 0.0
  %87 = vmatprep.subr.mxu0 0.0
  %88 = vmatpush1.msra.mxu0 0.0
  %89 = vmatprep.subr.mxu0 0.0
  %90 = vmatpush1.msra.mxu0 0.0
  %91 = vmatprep.mubr.f32.mxu0 0.0
  %92 = vmatmul.mubr.f32.gmra.mrb[0].mxu0 %v25
  %v93 = vpop.f32.mrb[0].mxu0
  %v94 = vadd.f32 %v21, %v93
  %v95 = vpop.f32.mrb[0].mxu0
  %96 = vdwg.mxu0
  %97 = vst [vmem:[%s3] sm:$0xff] %v94
  // Predicated region
  $region14: #{shortcut_forward.3} parent=0 // pred_check
    _
  $region15: #{shortcut_forward.3} parent=0 // pred_check_branch
    %99 = sbr.rel (0) target = $region17
  $region16: #{shortcut_forward.3} parent=0 // pred_region
    _
  $region17: #{shortcut_forward.3} parent=0 // pred_fallthru
    _
  // Predicated region
  $region18: #{shortcut_forward.3} parent=0 // pred_check
    _
  $region19: #{shortcut_forward.3} parent=0 // pred_check_branch
    %101 = sbr.rel (0) target = $region21
  $region20: #{shortcut_forward.3} parent=0 // pred_region
    _
  $region21: #{shortcut_forward.3} parent=0 // pred_fallthru
    _

</llo_original>
